<compile_context>
chip_gen: v7x
topology: tpu7x:2x2x1
jax: 0.10.0
libtpu: 0.0.40
codegen_flags: <defaults>
</compile_context>

<pallas_src>
import functools

import jax
import jax.numpy as jnp
from jax.experimental import pallas as pl
from jax.experimental.pallas import tpu as pltpu


def _rmsnorm_kernel(x_ref, g_ref, o_ref, *, scale, eps):
    # x_ref : (TR, dim)  -- one row-tile of the flattened input
    # g_ref : (1, dim)   -- gamma, broadcast over rows
    x = x_ref[...].astype(jnp.float32)

    # Fold the sqrt(dim) scale into gamma once per tile (negligible (1, dim) op).
    g_scaled = g_ref[...].astype(jnp.float32) * scale            # (1, dim)

    # Sum of squares over the last axis (lane reduction -> XLU).
    sumsq = jnp.sum(x * x, axis=-1, keepdims=True)               # (TR, 1)

    # Clamping sumsq at eps^2 is identical to clamping the L2 norm at eps
    # (sqrt is monotone).  rsqrt runs on the EUP -> its own VLIW slot, and we
    # avoid a full-width per-element divide on the VPU.
    inv = jax.lax.rsqrt(jnp.maximum(sumsq, eps * eps))           # (TR, 1)

    o_ref[...] = ((x * inv) * g_scaled).astype(o_ref.dtype)


def _choose_row_tile(rows, dim, dtype):
    """Pick a row-tile size that fits comfortably in scoped VMEM on all gens."""
    itemsize = jnp.dtype(dtype).itemsize
    # Per row of a tile: double-buffered input + output tiles (in x.dtype)
    # plus the f32 working copy used inside the body.
    bytes_per_row = dim * (4 * itemsize + 4)
    budget = 8 * 1024 * 1024          # conservative: fits v5e's 16 MiB scoped default
    tr_cap = budget // max(bytes_per_row, 1)
    tr_cap = max(8, min(2048, tr_cap))
    tr_cap = (tr_cap // 8) * 8        # sublane-aligned

    rows_min = ((rows + 7) // 8) * 8  # no point tiling larger than the input
    return min(tr_cap, rows_min)


def rmsnorm(x, gamma, *, eps=1e-12):
    """RMSNorm over the last axis of x. gamma has shape (dim,)."""
    dim = x.shape[-1]
    scale = float(dim) ** 0.5
    orig_shape = x.shape
    out_dtype = x.dtype

    # Flatten all leading dims into rows; normalized axis stays last (lanes).
    x2d = x.reshape(-1, dim)
    rows = x2d.shape[0]
    g2d = gamma.reshape(1, dim)

    tr = _choose_row_tile(rows, dim, x.dtype)
    num_tiles = pl.cdiv(rows, tr)
    rows_padded = num_tiles * tr
    if rows_padded != rows:
        # Zero-padded rows are harmless: sumsq=0 -> clamp -> output rows are 0,
        # and they are sliced off below.
        x2d = jnp.pad(x2d, ((0, rows_padded - rows), (0, 0)))

    kernel = functools.partial(_rmsnorm_kernel, scale=scale, eps=eps)

    out = pl.pallas_call(
        kernel,
        out_shape=jax.ShapeDtypeStruct((rows_padded, dim), out_dtype),
        grid=(num_tiles,),
        in_specs=[
            pl.BlockSpec((tr, dim), lambda i: (i, 0)),
            pl.BlockSpec((1, dim), lambda i: (0, 0)),
        ],
        out_specs=pl.BlockSpec((tr, dim), lambda i: (i, 0)),
        compiler_params=pltpu.CompilerParams(
            # Row tiles are independent -> shard across both TCs on v7x.
            dimension_semantics=("parallel",),
        ),
    )(x2d, g2d)

    if rows_padded != rows:
        out = out[:rows]
    return out.reshape(orig_shape)


def rmsnorm_ref(x, gamma, *, eps=1e-12):
    """Pure-JAX reference matching F.normalize(x, dim=-1) * sqrt(dim) * gamma."""
    dim = x.shape[-1]
    xf = x.astype(jnp.float32)
    norm = jnp.sqrt(jnp.sum(xf * xf, axis=-1, keepdims=True))
    y = xf / jnp.maximum(norm, eps)
    return (y * (float(dim) ** 0.5) * gamma.astype(jnp.float32)).astype(x.dtype)


if __name__ == "__main__":
    key = jax.random.PRNGKey(0)
    batch, seq, dim = 2, 8, 32

    x = jax.random.normal(key, (batch, seq, dim), dtype=jnp.float32)
    # Deterministic parameter init matching nn.Parameter(torch.ones(dim)).
    gamma = jnp.ones((dim,), dtype=jnp.float32)

    out = rmsnorm(x, gamma)
    out = jax.block_until_ready(out)

    ref = rmsnorm_ref(x, gamma)
    assert out.shape == x.shape
    assert jnp.allclose(out, ref, atol=1e-5, rtol=1e-5)

    # Also exercise a shape with a ragged last row-tile and larger rows to
    # check the padding / tiling path.
    x2 = jax.random.normal(jax.random.PRNGKey(1), (3, 37, dim), dtype=jnp.float32)
    out2 = jax.block_until_ready(rmsnorm(x2, gamma))
    assert jnp.allclose(out2, rmsnorm_ref(x2, gamma), atol=1e-5, rtol=1e-5)

    print("KERNEL_OK")
</pallas_src>

<mosaic_0001>
module attributes {stable_mosaic.version = 11 : i64} {
  func.func @_rmsnorm_kernel(%arg0: i32, %arg1: memref<16x32xf32, #tpu.memory_space<vmem>>, %arg2: memref<1x32xf32, #tpu.memory_space<vmem>>, %arg3: memref<16x32xf32, #tpu.memory_space<vmem>>) attributes {dimension_semantics = [#tpu.dimension_semantics<parallel>], iteration_bounds = array<i64: 1>, scalar_prefetch = 0 : i64, scratch_operands = 0 : i64, tpu.core_type = #tpu.core_type<tc>, window_params = [{transform_indices = @transform_0, window_bounds = array<i64: 16, 32>}, {pipeline_mode = #tpu.pipeline_mode<synchronous>, transform_indices = @transform_1, window_bounds = array<i64: 1, 32>}, {transform_indices = @transform_2, window_bounds = array<i64: 16, 32>}]} {
    %c0 = arith.constant 0 : index
    %c0_0 = arith.constant 0 : index
    %0 = vector.load %arg1[%c0, %c0_0] : memref<16x32xf32, #tpu.memory_space<vmem>>, vector<16x32xf32>
    %c0_1 = arith.constant 0 : index
    %c0_2 = arith.constant 0 : index
    %1 = vector.load %arg2[%c0_1, %c0_2] : memref<1x32xf32, #tpu.memory_space<vmem>>, vector<1x32xf32>
    %cst = arith.constant 5.65685415 : f32
    %2 = vector.broadcast %cst : f32 to vector<1x32xf32>
    %3 = arith.mulf %1, %2 : vector<1x32xf32>
    %4 = arith.mulf %0, %0 : vector<16x32xf32>
    %cst_3 = arith.constant dense<0.000000e+00> : vector<16xf32>
    %5 = vector.multi_reduction <add>, %4, %cst_3 [1] : vector<16x32xf32> to vector<16xf32>
    %6 = vector.shape_cast %5 : vector<16xf32> to vector<16x1xf32>
    %cst_4 = arith.constant 1.000000e-24 : f32
    %7 = vector.broadcast %cst_4 : f32 to vector<16x1xf32>
    %8 = arith.maximumf %6, %7 : vector<16x1xf32>
    %9 = math.rsqrt %8 : vector<16x1xf32>
    %10 = vector.broadcast %9 : vector<16x1xf32> to vector<16x32xf32>
    %11 = arith.mulf %0, %10 : vector<16x32xf32>
    %12 = vector.broadcast %3 : vector<1x32xf32> to vector<16x32xf32>
    %13 = arith.mulf %11, %12 : vector<16x32xf32>
    %c0_5 = arith.constant 0 : index
    %c0_6 = arith.constant 0 : index
    %14 = vector.load %arg3[%c0_5, %c0_6] : memref<16x32xf32, #tpu.memory_space<vmem>>, vector<16x32xf32>
    tpu.vector_store %arg3[%c0_5, %c0_6], %13 {strides = array<i32>} : memref<16x32xf32, #tpu.memory_space<vmem>>, vector<16x32xf32>,
    return
  }
  func.func @transform_0(%arg0: i32) -> (i32, i32) {
    %c0_i32 = arith.constant 0 : i32
    %c0_i32_0 = arith.constant 0 : i32
    return %arg0, %c0_i32 : i32, i32
  }
  func.func @transform_1(%arg0: i32) -> (i32, i32) {
    %c0_i32 = arith.constant 0 : i32
    %c0_i32_0 = arith.constant 0 : i32
    %c0_i32_1 = arith.constant 0 : i32
    return %c0_i32, %c0_i32_0 : i32, i32
  }
  func.func @transform_2(%arg0: i32) -> (i32, i32) {
    %c0_i32 = arith.constant 0 : i32
    %c0_i32_0 = arith.constant 0 : i32
    return %arg0, %c0_i32 : i32, i32
  }
}

</mosaic_0001>

<llo_original>
// kernel: tpu_custom_call.1
$region0: #{tpu_custom_call.1}
  #allocation0 [shape = 'u32[]', space=smem, size = 0x4, offset = 0x4, fixed_abs, tag = 'smem constant byte address 0x4 - core index']
  #allocation1 [shape = 'u32[144,128]{1,0:T(1,128)}', space=vmem, size = 0x12000, scoped, tag = 'internal scratch']
  %s0 = inlined_call_operand.hbm [shape: f32[16,32], index: 0, kind: input, shape index: {}]
  %s1 = inlined_call_operand.vmem [shape: f32[1,32], index: 1, kind: input, shape index: {}]
  %s2 = inlined_call_operand.hbm [shape: f32[16,32], index: 2, kind: output, shape index: {}]
  %s3 = sld [smem:[#allocation0]]
  $region22: #{tpu_custom_call.1} parent=0
    _
  %s5 = ssub.s32 1, %s3
  %s6 = scalar_select 0, %s5, %s3
  $region1: #{tpu_custom_call.1} parent=0
    #allocation2 [shape = 'u8[8192]{0}', space=vmem, size = 0x2000, scoped, tag = 'input window, operand 0, single buffered']
    #allocation3 [shape = 's32[1]{0}', space=sflag, size = 0x4, scoped, tag = 'scoped memory for tpu_custom_call.1']
    #allocation4 [shape = 's32[1]{0}', space=sflag, size = 0x4, scoped, tag = 'scoped memory for tpu_custom_call.1']
    #allocation5 [shape = 'u8[8192]{0}', space=vmem, size = 0x2000, scoped, tag = 'output window, operand 0, single buffered']
    %7 = vsyncpa [#allocation3], 0
    %8 = vsyncpa [#allocation4], 0
    // Predicated region
    $region2: #{tpu_custom_call.1} parent=1 // pred_check
      _
    $region3: #{tpu_custom_call.1} parent=1 // pred_check_branch
      %10 = sbr.rel (0) target = $region5
    $region4: #{tpu_custom_call.1} parent=1 // pred_region
      %s12 = ssub.s32 256, 256
      %13 = vsyncadd [#allocation3], %s12
      %s14 = sshll.u32 [#allocation2], 4
      %s15 = int_to_ptr.vmem [resolvable:$true] %s14
      %20 = dma.hbm_to_vmem [thread:$0]  %s0, 256, %s15, [#allocation3], 128, 128, 8
    $region5: #{tpu_custom_call.1} parent=1 // pred_fallthru
      _
    // Predicated region
    $region6: #{tpu_custom_call.1} parent=1 // pred_check
      _
    $region7: #{tpu_custom_call.1} parent=1 // pred_check_branch
      %22 = sbr.rel (0) target = $region9
    $region8: #{tpu_custom_call.1} parent=1 // pred_region
      _
    $region9: #{tpu_custom_call.1} parent=1 // pred_fallthru
      _
    // Predicated region
    $region10: #{tpu_custom_call.1} parent=1 // pred_check
      _
    $region11: #{tpu_custom_call.1} parent=1 // pred_check_branch
      %24 = sbr.rel (0) target = $region13
    $region12: #{tpu_custom_call.1} parent=1 // pred_region
      %25 = dma.done [#allocation3], 256
    $region13: #{tpu_custom_call.1} parent=1 // pred_fallthru
      _
    %v26 = vld [vmem:[#allocation2] sm:$0xff]
    %v27 = vld [vmem:[#allocation2 + $0x8] sm:$0xff]
    %v28 = vld [vmem:[%s1] sm:$0x1]
    %v29 = vmul.f32 %v28, 5.656854
    %v30 = vmul.f32 %v26, %v26
    %v31 = vmul.f32 %v27, %v27
    %vm32 = vcmask 261120
    %v33 = vsel %vm32, %v30, 0.0
    %34 = vadd.xlane.f32.xlu0 %v33
    %v35 = vpop.xlane.xlu0 %34
    %v36 = vsel %vm32, %v31, 0.0
    %37 = vadd.xlane.f32.xlu0 %v36
    %v38 = vpop.xlane.xlu0 %37
    %v39 = vmax.f32 %v35, 1e-24
    %v40 = vmax.f32 %v38, 1e-24
    %v41 = vrsqrt.pop %v39
    %v42 = vrsqrt.pop %v40
    %v43 = vmul.f32 %v26, %v41
    %v44 = vmul.f32 %v27, %v42
    %v46 = vlaneseq
    %v47 = vshrl.u32 %v46, 7
    %v48 = vsub.s32 0, %v47
    %v49 = vrot.slane %v29, %v48
    %v51 = vmul.f32 %v43, %v49
    %v52 = vmul.f32 %v44, %v49
    %53 = vst.msk [vmem:[#allocation5] sm:$0xff] %vm32, %v51
    %54 = vst.msk [vmem:[#allocation5 + $0x8] sm:$0xff] %vm32, %v52
    // Predicated region
    $region14: #{tpu_custom_call.1} parent=1 // pred_check
      _
    $region15: #{tpu_custom_call.1} parent=1 // pred_check_branch
      %56 = sbr.rel (0) target = $region17
    $region16: #{tpu_custom_call.1} parent=1 // pred_region
      %s58 = ssub.s32 256, 256
      %59 = vsyncadd [#allocation4], %s58
      %s60 = sshll.u32 [#allocation5], 4
      %s61 = int_to_ptr.vmem [resolvable:$true] %s60
      %66 = dma.vmem_to_hbm [thread:$0]  %s61, 256, %s2, [#allocation4], 128, 128, 8
    $region17: #{tpu_custom_call.1} parent=1 // pred_fallthru
      _
    // Predicated region
    $region18: #{tpu_custom_call.1} parent=1 // pred_check
      _
    $region19: #{tpu_custom_call.1} parent=1 // pred_check_branch
      %68 = sbr.rel (0) target = $region21
    $region20: #{tpu_custom_call.1} parent=1 // pred_region
      %69 = dma.done [#allocation4], 256
    $region21: #{tpu_custom_call.1} parent=1 // pred_fallthru
      _
    %70 = vsyncpa [#allocation3], 1
    %71 = vsyncpa [#allocation4], 1

</llo_original>
